<compile_context>
chip_gen: v6e
topology: v6e:2x2x1
jax: 0.10.0
libtpu: 0.0.40
codegen_flags: <defaults>
</compile_context>

<pallas_src>
import jax
import jax.numpy as jnp
from jax.experimental import pallas as pl
from jax.experimental.pallas import tpu as pltpu


def _make_vdn_sum_kernel(acc_dtype):
    def kernel(q_ref, o_ref):
        # q_ref block: (A, TB, TD); o_ref block: (1, TB, TD).
        acc = jnp.sum(q_ref[...].astype(acc_dtype), axis=0, keepdims=True)
        o_ref[...] = acc.astype(o_ref.dtype)
    return kernel


def _largest_divisor_tile(dim, cap, step):
    """Largest multiple of `step` that divides `dim` and is <= cap, else full dim."""
    cands = [c for c in range(step, min(cap, dim) + 1, step) if dim % c == 0]
    return max(cands) if cands else dim


def _choose_tiles(A, B, D, itemsize, vmem_budget_bytes=20 << 20):
    # Lane-dense last dim (multiple of 128), sublane-friendly second-last
    # (multiple of 8); fall back to the full extent when no clean divisor.
    TB = _largest_divisor_tile(B, 512, 8)
    TD = _largest_divisor_tile(D, 512, 128)

    def bytes_used(tb, td):
        in_blk = A * tb * td * itemsize
        out_blk = 1 * tb * td * itemsize
        return 2 * (in_blk + out_blk)  # double-buffered by the pipeline

    # Shrink tiles (keeping (8,128) alignment and divisibility) until the
    # working set fits the VMEM budget — sized for v7x's 64 MiB VMEM.
    while bytes_used(TB, TD) > vmem_budget_bytes:
        if TB >= 16 and (TB // 2) % 8 == 0 and B % (TB // 2) == 0:
            TB //= 2
        elif TD >= 256 and (TD // 2) % 128 == 0 and D % (TD // 2) == 0:
            TD //= 2
        else:
            break
    return TB, TD


def comm_vdn_mixer(agent_qs: jax.Array) -> jax.Array:
    """Sum over the agent axis (dim 0) with keepdim=True, via Pallas.

    agent_qs: (A, B, D) array.
    returns:  (1, B, D) array, same dtype as input.
    """
    A, B, D = agent_qs.shape
    out_dtype = agent_qs.dtype
    acc_dtype = (
        jnp.float32 if jnp.issubdtype(out_dtype, jnp.floating) else out_dtype
    )

    TB, TD = _choose_tiles(A, B, D, jnp.dtype(out_dtype).itemsize)
    grid = (B // TB, D // TD)

    return pl.pallas_call(
        _make_vdn_sum_kernel(acc_dtype),
        out_shape=jax.ShapeDtypeStruct((1, B, D), out_dtype),
        grid=grid,
        in_specs=[pl.BlockSpec((A, TB, TD), lambda i, j: (0, i, j))],
        out_specs=pl.BlockSpec((1, TB, TD), lambda i, j: (0, i, j)),
        compiler_params=pltpu.CompilerParams(
            # Both grid axes are independent output tiles -> shardable across
            # TensorCores on v7x; no reduction axis remains in the grid.
            dimension_semantics=("parallel", "parallel"),
            vmem_limit_bytes=32 << 20,
        ),
    )(agent_qs)


if __name__ == "__main__":
    key = jax.random.PRNGKey(0)

    # Small shapes consistent with the module: 4 agents, batch 8, q-dim 128.
    # TODO(synk): at this tiny size plain jnp.sum would beat any Pallas call;
    # the kernel is written for (and pays off at) large B*D.
    A, B, D = 4, 8, 128
    agent_qs = jax.random.normal(key, (A, B, D), dtype=jnp.float32)

    out = comm_vdn_mixer(agent_qs)
    out = jax.block_until_ready(out)

    ref = jnp.sum(agent_qs, axis=0, keepdims=True)
    assert out.shape == (1, B, D), out.shape
    assert jnp.allclose(out, ref, atol=1e-6, rtol=1e-6)

    # bf16 path: kernel accumulates in f32 (matching torch's promoted sum).
    agent_qs_bf16 = agent_qs.astype(jnp.bfloat16)
    out_bf16 = jax.block_until_ready(comm_vdn_mixer(agent_qs_bf16))
    ref_bf16 = jnp.sum(
        agent_qs_bf16.astype(jnp.float32), axis=0, keepdims=True
    ).astype(jnp.bfloat16)
    assert out_bf16.shape == (1, B, D)
    assert jnp.allclose(
        out_bf16.astype(jnp.float32), ref_bf16.astype(jnp.float32),
        atol=1e-2, rtol=1e-2,
    )

    print("KERNEL_OK")
</pallas_src>

<mosaic_0001>
module attributes {stable_mosaic.version = 11 : i64} {
  func.func @kernel(%arg0: i32, %arg1: i32, %arg2: memref<4x8x128xf32, #tpu.memory_space<vmem>>, %arg3: memref<1x8x128xf32, #tpu.memory_space<vmem>>) attributes {dimension_semantics = [#tpu.dimension_semantics<parallel>, #tpu.dimension_semantics<parallel>], iteration_bounds = array<i64: 1, 1>, scalar_prefetch = 0 : i64, scratch_operands = 0 : i64, tpu.core_type = #tpu.core_type<tc>, window_params = [{transform_indices = @transform_0, window_bounds = array<i64: 4, 8, 128>}, {transform_indices = @transform_1, window_bounds = array<i64: 1, 8, 128>}]} {
    %c0 = arith.constant 0 : index
    %c0_0 = arith.constant 0 : index
    %c0_1 = arith.constant 0 : index
    %0 = vector.load %arg2[%c0, %c0_0, %c0_1] : memref<4x8x128xf32, #tpu.memory_space<vmem>>, vector<4x8x128xf32>
    %cst = arith.constant dense<0.000000e+00> : vector<8x128xf32>
    %1 = vector.multi_reduction <add>, %0, %cst [0] : vector<4x8x128xf32> to vector<8x128xf32>
    %2 = vector.shape_cast %1 : vector<8x128xf32> to vector<1x8x128xf32>
    %c0_2 = arith.constant 0 : index
    %c0_3 = arith.constant 0 : index
    %c0_4 = arith.constant 0 : index
    %3 = vector.load %arg3[%c0_2, %c0_3, %c0_4] : memref<1x8x128xf32, #tpu.memory_space<vmem>>, vector<1x8x128xf32>
    tpu.vector_store %arg3[%c0_2, %c0_3, %c0_4], %2 {strides = array<i32>} : memref<1x8x128xf32, #tpu.memory_space<vmem>>, vector<1x8x128xf32>,
    return
  }
  func.func @transform_0(%arg0: i32, %arg1: i32) -> (i32, i32, i32) {
    %c0_i32 = arith.constant 0 : i32
    %c0_i32_0 = arith.constant 0 : i32
    return %c0_i32, %arg0, %arg1 : i32, i32, i32
  }
  func.func @transform_1(%arg0: i32, %arg1: i32) -> (i32, i32, i32) {
    %c0_i32 = arith.constant 0 : i32
    %c0_i32_0 = arith.constant 0 : i32
    return %c0_i32, %arg0, %arg1 : i32, i32, i32
  }
}

</mosaic_0001>

<llo_original>
// kernel: tpu_custom_call.1
$region0: #{tpu_custom_call.1}
  #allocation0 [shape = 'u32[]', space=smem, size = 0x4, offset = 0x4, fixed_abs, tag = 'smem constant byte address 0x4 - core index']
  #allocation1 [shape = 'u32[144,128]{1,0:T(1,128)}', space=vmem, size = 0x12000, scoped, tag = 'internal scratch']
  %s0 = inlined_call_operand.hbm [shape: f32[4,8,128], index: 0, kind: input, shape index: {}]
  %s1 = inlined_call_operand.hbm [shape: f32[1,8,128], index: 1, kind: output, shape index: {}]
  %s2 = sld [smem:[#allocation0]]
  $region18: #{tpu_custom_call.1} parent=0
    _
  %s4 = ssub.s32 1, %s2
  %s5 = scalar_select 0, %s4, %s2
  $region1: #{tpu_custom_call.1} parent=0
    #allocation2 [shape = 'u8[16384]{0}', space=vmem, size = 0x4000, scoped, tag = 'input window, operand 0, single buffered']
    #allocation3 [shape = 's32[1]{0}', space=sflag, size = 0x4, scoped, tag = 'scoped memory for tpu_custom_call.1']
    #allocation4 [shape = 's32[1]{0}', space=sflag, size = 0x4, scoped, tag = 'scoped memory for tpu_custom_call.1']
    #allocation5 [shape = 'u8[4096]{0}', space=vmem, size = 0x1000, scoped, tag = 'output window, operand 0, single buffered']
    %6 = vsyncpa [#allocation3], 0
    %7 = vsyncpa [#allocation4], 0
    // Predicated region
    $region2: #{tpu_custom_call.1} parent=1 // pred_check
      _
    $region3: #{tpu_custom_call.1} parent=1 // pred_check_branch
      %9 = sbr.rel (0) target = $region5
    $region4: #{tpu_custom_call.1} parent=1 // pred_region
      %s11 = ssub.s32 512, 512
      %12 = vsyncadd [#allocation3], %s11
      %s13 = sshll.u32 [#allocation2], 4
      %s14 = int_to_ptr.vmem [resolvable:$true] %s13
      %19 = dma.hbm_to_vmem [thread:$0]  %s0, 512, %s14, [#allocation3], 128, 128, 8
    $region5: #{tpu_custom_call.1} parent=1 // pred_fallthru
      _
    // Predicated region
    $region6: #{tpu_custom_call.1} parent=1 // pred_check
      _
    $region7: #{tpu_custom_call.1} parent=1 // pred_check_branch
      %21 = sbr.rel (0) target = $region9
    $region8: #{tpu_custom_call.1} parent=1 // pred_region
      %22 = dma.done [#allocation3], 512
    $region9: #{tpu_custom_call.1} parent=1 // pred_fallthru
      _
    %v23 = vld [vmem:[#allocation2] sm:$0xff]
    %v24 = vld [vmem:[#allocation2 + $0x8] sm:$0xff]
    %v25 = vld [vmem:[#allocation2 + $0x10] sm:$0xff]
    %v26 = vld [vmem:[#allocation2 + $0x18] sm:$0xff]
    %v27 = vadd.f32 %v23, %v24
    %v28 = vadd.f32 %v27, %v25
    %v29 = vadd.f32 %v28, %v26
    %30 = vst [vmem:[#allocation5] sm:$0xff] %v29
    // Predicated region
    $region10: #{tpu_custom_call.1} parent=1 // pred_check
      _
    $region11: #{tpu_custom_call.1} parent=1 // pred_check_branch
      %32 = sbr.rel (0) target = $region13
    $region12: #{tpu_custom_call.1} parent=1 // pred_region
      %s34 = ssub.s32 128, 128
      %35 = vsyncadd [#allocation4], %s34
      %s37 = sshll.u32 [#allocation5], 4
      %s38 = int_to_ptr.vmem [resolvable:$true] %s37
      %40 = dma.vmem_to_hbm [thread:$0]  %s38, 128, %s1, [#allocation4]
    $region13: #{tpu_custom_call.1} parent=1 // pred_fallthru
      _
    // Predicated region
    $region14: #{tpu_custom_call.1} parent=1 // pred_check
      _
    $region15: #{tpu_custom_call.1} parent=1 // pred_check_branch
      %42 = sbr.rel (0) target = $region17
    $region16: #{tpu_custom_call.1} parent=1 // pred_region
      %43 = dma.done [#allocation4], 128
    $region17: #{tpu_custom_call.1} parent=1 // pred_fallthru
      _
    %44 = vsyncpa [#allocation3], 1
    %45 = vsyncpa [#allocation4], 1

</llo_original>
